<compile_context>
chip_gen: v7x
topology: tpu7x:2x2x1
jax: 0.10.0
libtpu: 0.0.40
codegen_flags: <defaults>
</compile_context>

<pallas_src>
import functools

import jax
import jax.numpy as jnp
from jax.experimental import pallas as pl
from jax.experimental.pallas import tpu as pltpu


def _freqpool_conv_temppool_kernel(x_ref, wt_ref, b_ref, o_ref, *, inv_ft, batch, c_in):
    # x_ref : (B*C_in, F*T)  lane-dense slab; row b*C_in + c = (batch b, channel c)
    # wt_ref: (C_in, C_out)  transposed 1x1-conv weight
    # b_ref : (1, C_out)
    # o_ref : (B, C_out)
    x = x_ref[...].astype(jnp.float32)                          # upcast per-tile

    # Fused frequency+temporal mean: one lane-dense sum + one scale (no divides).
    pooled = jnp.sum(x, axis=-1, keepdims=True) * inv_ft        # (B*C_in, 1)

    wt = wt_ref[...].astype(jnp.float32)                        # (C_in, C_out)

    # 1x1-conv channel mix on the VPU/XLU (skip the MXU entirely at K=C_in=4):
    # for each batch's C_in-row group, broadcast against the weight and reduce
    # over the C_in sublanes.  All slices are static; loop unrolls at trace time.
    rows = []
    for bi in range(batch):
        pb = pooled[bi * c_in:(bi + 1) * c_in, :]               # (C_in, 1) static slice
        rows.append(jnp.sum(pb * wt, axis=0, keepdims=True))    # (1, C_out)
    acc = rows[0] if batch == 1 else jnp.concatenate(rows, axis=0)   # (B, C_out)

    o_ref[...] = (acc + b_ref[...].astype(jnp.float32)).astype(o_ref.dtype)


def freqpool_conv_temppool(x, weight, bias):
    """x: (B, C_in, F, T); weight: (C_out, C_in) or (C_out, C_in, 1, 1); bias: (C_out,) -> (B, C_out)."""
    B, C_in, F, T = x.shape
    # The algebraic collapse (pool-F and mean-T commuted through the conv) is
    # only valid for a 1x1 conv with the full-F pool window used by the module.
    if weight.ndim == 4:
        assert weight.shape[2:] == (1, 1), "kernel assumes a 1x1 Conv2d"
    assert weight.shape[1] == C_in, "conv in_channels must match x's channel dim"
    C_out = weight.shape[0]
    FT = F * T

    # Wrapper-side layout plumbing (free in XLA):
    #  * (B*C_in, FT) slab -> dense DMA, full 8x128 vreg occupancy
    #  * weight transposed so C_out lives on the lane axis
    #  * bias as a 2-D (1, C_out) row
    x2 = x.reshape(B * C_in, FT)
    wt = weight.reshape(C_out, C_in).T
    bias2d = bias.reshape(1, C_out)

    kernel = functools.partial(
        _freqpool_conv_temppool_kernel,
        inv_ft=1.0 / float(FT), batch=B, c_in=C_in,
    )

    cost = pl.CostEstimate(
        flops=2 * B * C_in * FT + 2 * B * C_in * C_out,
        transcendentals=0,
        bytes_accessed=4 * (B * C_in * FT + C_in * C_out + C_out + B * C_out),
    )

    # No grid: the whole problem (~8 KiB of HBM traffic) is a single full-array
    # VMEM block; a 1-point grid would only add per-step pipeline machinery.
    return pl.pallas_call(
        kernel,
        out_shape=jax.ShapeDtypeStruct((B, C_out), jnp.float32),
        in_specs=[
            pl.BlockSpec(memory_space=pltpu.MemorySpace.VMEM),
            pl.BlockSpec(memory_space=pltpu.MemorySpace.VMEM),
            pl.BlockSpec(memory_space=pltpu.MemorySpace.VMEM),
        ],
        out_specs=pl.BlockSpec(memory_space=pltpu.MemorySpace.VMEM),
        cost_estimate=cost,
    )(x2, wt, bias2d)


def _reference(x, weight, bias):
    # Literal translation of the PyTorch graph (pool F -> 1x1 conv -> mean T).
    pooled = jnp.mean(x.astype(jnp.float32), axis=2)                     # (B, C_in, T)
    w = weight.reshape(weight.shape[0], -1).astype(jnp.float32)          # (C_out, C_in)
    y = jnp.einsum("oc,bct->bot", w, pooled)
    y = y + bias.astype(jnp.float32)[None, :, None]
    return jnp.mean(y, axis=-1)                                          # (B, C_out)


if __name__ == "__main__":
    # Module config: Conv2d(in_channels=4, out_channels=8, kernel_size=1, bias=True)
    B, C_in, F, T = 2, 4, 16, 16
    C_out = 8

    key = jax.random.PRNGKey(0)
    kx, kw, kb = jax.random.split(key, 3)
    x = jax.random.normal(kx, (B, C_in, F, T), dtype=jnp.float32)
    weight = jax.random.normal(kw, (C_out, C_in), dtype=jnp.float32) * 0.1
    bias = jax.random.normal(kb, (C_out,), dtype=jnp.float32) * 0.1

    out = freqpool_conv_temppool(x, weight, bias)
    out = jax.block_until_ready(out)

    ref = _reference(x, weight, bias)
    assert out.shape == (B, C_out)
    assert jnp.allclose(out, ref, atol=1e-5, rtol=1e-4), (out, ref)

    print("KERNEL_OK")
</pallas_src>

<mosaic_0001>
module attributes {stable_mosaic.version = 11 : i64} {
  func.func @_freqpool_conv_temppool_kernel(%arg0: memref<8x256xf32, #tpu.memory_space<vmem>>, %arg1: memref<4x8xf32, #tpu.memory_space<vmem>>, %arg2: memref<1x8xf32, #tpu.memory_space<vmem>>, %arg3: memref<2x8xf32, #tpu.memory_space<vmem>>) attributes {dimension_semantics = [], scalar_prefetch = 0 : i64, scratch_operands = 0 : i64, tpu.core_type = #tpu.core_type<tc>} {
    %c0 = arith.constant 0 : index
    %c0_0 = arith.constant 0 : index
    %0 = vector.load %arg0[%c0, %c0_0] : memref<8x256xf32, #tpu.memory_space<vmem>>, vector<8x256xf32>
    %cst = arith.constant dense<0.000000e+00> : vector<8xf32>
    %1 = vector.multi_reduction <add>, %0, %cst [1] : vector<8x256xf32> to vector<8xf32>
    %2 = vector.shape_cast %1 : vector<8xf32> to vector<8x1xf32>
    %cst_1 = arith.constant 3.906250e-03 : f32
    %3 = vector.broadcast %cst_1 : f32 to vector<8x1xf32>
    %4 = arith.mulf %2, %3 : vector<8x1xf32>
    %c0_2 = arith.constant 0 : index
    %c0_3 = arith.constant 0 : index
    %5 = vector.load %arg1[%c0_2, %c0_3] : memref<4x8xf32, #tpu.memory_space<vmem>>, vector<4x8xf32>
    %6 = vector.extract_strided_slice %4 {offsets = [0, 0], sizes = [4, 1], strides = [1, 1]} : vector<8x1xf32> to vector<4x1xf32>
    %7 = vector.broadcast %6 : vector<4x1xf32> to vector<4x8xf32>
    %8 = arith.mulf %7, %5 : vector<4x8xf32>
    %cst_4 = arith.constant dense<0.000000e+00> : vector<8xf32>
    %9 = vector.multi_reduction <add>, %8, %cst_4 [0] : vector<4x8xf32> to vector<8xf32>
    %10 = vector.shape_cast %9 : vector<8xf32> to vector<1x8xf32>
    %11 = vector.extract_strided_slice %4 {offsets = [4, 0], sizes = [4, 1], strides = [1, 1]} : vector<8x1xf32> to vector<4x1xf32>
    %12 = vector.broadcast %11 : vector<4x1xf32> to vector<4x8xf32>
    %13 = arith.mulf %12, %5 : vector<4x8xf32>
    %cst_5 = arith.constant dense<0.000000e+00> : vector<8xf32>
    %14 = vector.multi_reduction <add>, %13, %cst_5 [0] : vector<4x8xf32> to vector<8xf32>
    %15 = vector.shape_cast %14 : vector<8xf32> to vector<1x8xf32>
    %16 = tpu.concatenate %10, %15 in 0 : vector<1x8xf32>, vector<1x8xf32> -> vector<2x8xf32>
    %c0_6 = arith.constant 0 : index
    %c0_7 = arith.constant 0 : index
    %17 = vector.load %arg2[%c0_6, %c0_7] : memref<1x8xf32, #tpu.memory_space<vmem>>, vector<1x8xf32>
    %18 = vector.broadcast %17 : vector<1x8xf32> to vector<2x8xf32>
    %19 = arith.addf %16, %18 : vector<2x8xf32>
    %c0_8 = arith.constant 0 : index
    %c0_9 = arith.constant 0 : index
    %20 = vector.load %arg3[%c0_8, %c0_9] : memref<2x8xf32, #tpu.memory_space<vmem>>, vector<2x8xf32>
    tpu.vector_store %arg3[%c0_8, %c0_9], %19 {strides = array<i32>} : memref<2x8xf32, #tpu.memory_space<vmem>>, vector<2x8xf32>,
    return
  }
}

</mosaic_0001>

<llo_original>
// kernel: tpu_custom_call.1
$region0: #{tpu_custom_call.1}
  #allocation0 [shape = 'u32[]', space=smem, size = 0x4, offset = 0x4, fixed_abs, tag = 'smem constant byte address 0x4 - core index']
  #allocation1 [shape = 'u32[144,128]{1,0:T(1,128)}', space=vmem, size = 0x12000, scoped, tag = 'internal scratch']
  %s0 = inlined_call_operand.hbm [shape: f32[8,256], index: 0, kind: input, shape index: {}]
  %s1 = inlined_call_operand.hbm [shape: f32[4,8], index: 1, kind: input, shape index: {}]
  %s2 = inlined_call_operand.vmem [shape: f32[1,8], index: 2, kind: input, shape index: {}]
  %s3 = inlined_call_operand.hbm [shape: f32[2,8], index: 3, kind: output, shape index: {}]
  %s4 = sld [smem:[#allocation0]]
  $region30: #{tpu_custom_call.1} parent=0
    _
  %s6 = ssub.s32 1, %s4
  %s7 = scalar_select 0, %s6, %s4
  $region1: #{tpu_custom_call.1} parent=0
    #allocation2 [shape = 'u8[8192]{0}', space=vmem, size = 0x2000, scoped, tag = 'input window, operand 0, single buffered']
    #allocation3 [shape = 's32[1]{0}', space=sflag, size = 0x4, scoped, tag = 'scoped memory for tpu_custom_call.1']
    #allocation4 [shape = 's32[1]{0}', space=sflag, size = 0x4, scoped, tag = 'scoped memory for tpu_custom_call.1']
    #allocation5 [shape = 'u8[2048]{0}', space=vmem, size = 0x800, scoped, tag = 'input window, operand 1, single buffered']
    #allocation6 [shape = 's32[1]{0}', space=sflag, size = 0x4, scoped, tag = 'scoped memory for tpu_custom_call.1']
    #allocation7 [shape = 'u8[1024]{0}', space=vmem, size = 0x400, scoped, tag = 'output window, operand 0, single buffered']
    %8 = vsyncpa [#allocation3], 0
    %9 = vsyncpa [#allocation6], 0
    %10 = vsyncpa [#allocation4], 0
    // Predicated region
    $region2: #{tpu_custom_call.1} parent=1 // pred_check
      _
    $region3: #{tpu_custom_call.1} parent=1 // pred_check_branch
      %12 = sbr.rel (0) target = $region5
    $region4: #{tpu_custom_call.1} parent=1 // pred_region
      %s14 = ssub.s32 256, 256
      %15 = vsyncadd [#allocation3], %s14
      %s17 = sshll.u32 [#allocation2], 4
      %s18 = int_to_ptr.vmem [resolvable:$true] %s17
      %20 = dma.hbm_to_vmem [thread:$0]  %s0, 256, %s18, [#allocation3]
    $region5: #{tpu_custom_call.1} parent=1 // pred_fallthru
      _
    // Predicated region
    $region6: #{tpu_custom_call.1} parent=1 // pred_check
      _
    $region7: #{tpu_custom_call.1} parent=1 // pred_check_branch
      %22 = sbr.rel (0) target = $region9
    $region8: #{tpu_custom_call.1} parent=1 // pred_region
      %s24 = ssub.s32 64, 64
      %25 = vsyncadd [#allocation6], %s24
      %s27 = sshll.u32 [#allocation5], 4
      %s28 = int_to_ptr.vmem [resolvable:$true] %s27
      %30 = dma.hbm_to_vmem [thread:$0]  %s1, 64, %s28, [#allocation6]
    $region9: #{tpu_custom_call.1} parent=1 // pred_fallthru
      _
    // Predicated region
    $region10: #{tpu_custom_call.1} parent=1 // pred_check
      _
    $region11: #{tpu_custom_call.1} parent=1 // pred_check_branch
      %32 = sbr.rel (0) target = $region13
    $region12: #{tpu_custom_call.1} parent=1 // pred_region
      _
    $region13: #{tpu_custom_call.1} parent=1 // pred_fallthru
      _
    // Predicated region
    $region14: #{tpu_custom_call.1} parent=1 // pred_check
      _
    $region15: #{tpu_custom_call.1} parent=1 // pred_check_branch
      %34 = sbr.rel (0) target = $region17
    $region16: #{tpu_custom_call.1} parent=1 // pred_region
      %35 = dma.done [#allocation3], 256
    $region17: #{tpu_custom_call.1} parent=1 // pred_fallthru
      _
    // Predicated region
    $region18: #{tpu_custom_call.1} parent=1 // pred_check
      _
    $region19: #{tpu_custom_call.1} parent=1 // pred_check_branch
      %37 = sbr.rel (0) target = $region21
    $region20: #{tpu_custom_call.1} parent=1 // pred_region
      %38 = dma.done [#allocation6], 64
    $region21: #{tpu_custom_call.1} parent=1 // pred_fallthru
      _
    %v39 = vld [vmem:[#allocation2] sm:$0xff]
    %v40 = vld [vmem:[#allocation2 + $0x8] sm:$0xff]
    %v41 = vadd.f32 %v39, %v40
    %42 = vadd.xlane.f32.xlu0 %v41
    %v43 = vpop.xlane.xlu0 %42
    %v44 = vmul.f32 %v43, 0.00390625
    %v45 = vld [vmem:[#allocation5] sm:$0xf]
    %v46 = vmul.f32 %v44, %v45
    %vm47 = vcmask 60416
    %v48 = vsel %vm47, %v46, 0.0
    %v49 = vrot.slane %v48, 4
    %v50 = vadd.f32 %v48, %v49
    %v51 = vrot.slane %v50, 2
    %v52 = vadd.f32 %v50, %v51
    %v53 = vrot.slane %v52, 1
    %v54 = vadd.f32 %v52, %v53
    %v56 = vrot.slane %v45, 4
    %v58 = vmul.f32 %v44, %v56
    %v60 = vrot.slane %v58, 4
    %v62 = vsel %vm47, %v60, 0.0
    %v63 = vrot.slane %v62, 4
    %v64 = vadd.f32 %v62, %v63
    %v65 = vrot.slane %v64, 2
    %v66 = vadd.f32 %v64, %v65
    %v67 = vrot.slane %v66, 1
    %v68 = vadd.f32 %v66, %v67
    %vm69 = vcmask 1040384
    %v70 = vsel %vm69, %v54, %v68
    %v71 = vld [vmem:[%s2] sm:$0x1]
    %v73 = vlaneseq
    %v74 = vshrl.u32 %v73, 7
    %v75 = vsub.s32 0, %v74
    %v76 = vrot.slane %v71, %v75
    %v78 = vadd.f32 %v70, %v76
    %vm79 = vcmask 58368
    %80 = vst.msk [vmem:[#allocation7] sm:$0x3] %vm79, %v78
    // Predicated region
    $region22: #{tpu_custom_call.1} parent=1 // pred_check
      _
    $region23: #{tpu_custom_call.1} parent=1 // pred_check_branch
      %82 = sbr.rel (0) target = $region25
    $region24: #{tpu_custom_call.1} parent=1 // pred_region
      %s84 = ssub.s32 32, 32
      %85 = vsyncadd [#allocation4], %s84
      %s87 = sshll.u32 [#allocation7], 4
      %s88 = int_to_ptr.vmem [resolvable:$true] %s87
      %90 = dma.vmem_to_hbm [thread:$0]  %s88, 32, %s3, [#allocation4]
    $region25: #{tpu_custom_call.1} parent=1 // pred_fallthru
      _
    // Predicated region
    $region26: #{tpu_custom_call.1} parent=1 // pred_check
      _
    $region27: #{tpu_custom_call.1} parent=1 // pred_check_branch
      %92 = sbr.rel (0) target = $region29
    $region28: #{tpu_custom_call.1} parent=1 // pred_region
      %93 = dma.done [#allocation4], 32
    $region29: #{tpu_custom_call.1} parent=1 // pred_fallthru
      _
    %94 = vsyncpa [#allocation3], 1
    %95 = vsyncpa [#allocation6], 1
    %96 = vsyncpa [#allocation4], 1

</llo_original>
